<compile_context>
chip_gen: v5e
topology: v5e:2x2
jax: 0.10.0
libtpu: 0.0.40
codegen_flags: <defaults>
</compile_context>

<pallas_src>
import jax
import jax.numpy as jnp
from jax.experimental import pallas as pl
from jax.experimental.pallas import tpu as pltpu


def get_atom_feature_dims():
    # Matches ogb.utils.features.get_atom_feature_dims()
    return [119, 4, 12, 12, 10, 6, 6, 2, 2]


def _round_up(v, m):
    return ((v + m - 1) // m) * m


def _const_index_map(ndim):
    zeros = (0,) * ndim
    return lambda i: zeros


# ---------------------------------------------------------------------------
# Pallas kernel: fused stack of Linear (+ReLU) layers for ALL heads at once.
# ---------------------------------------------------------------------------
def _make_fused_kernel(layer_kinds, num_heads, hidden_size):
    """layer_kinds: per-linear-layer packing, each 'dense' or 'grouped'."""
    num_linear = len(layer_kinds)

    def kernel(*refs):
        x_ref = refs[0]
        out_ref = refs[-1]
        h = x_ref[...]                      # bf16 activations feed the MXU directly
        idx = 1
        for li, kind in enumerate(layer_kinds):
            w_ref = refs[idx]
            b_ref = refs[idx + 1]
            idx += 2
            b = b_ref[...]                  # f32 bias (BN eval affine pre-folded)
            if kind == "dense":
                acc = jnp.dot(h, w_ref[...], preferred_element_type=jnp.float32)
            else:
                # grouped: w_ref is [num_heads, hidden, hidden]; 9 small MXU dots
                # instead of one 9x-larger block-diagonal dot.
                parts = []
                for hi in range(num_heads):
                    hh = h[:, hi * hidden_size:(hi + 1) * hidden_size]
                    parts.append(
                        jnp.dot(hh, w_ref[hi], preferred_element_type=jnp.float32))
                acc = jnp.concatenate(parts, axis=1)
            acc = acc + b
            if li < num_linear - 1:
                acc = jnp.maximum(acc, 0.0)       # ReLU (dropout: eval -> identity)
                h = acc.astype(jnp.bfloat16)      # bf16 inter-layer activations
            else:
                out_ref[...] = acc.astype(out_ref.dtype)

    return kernel


def fused_mol_decoder_call(fused, x, max_row_tile=512):
    """Run the fused decoder (all heads) through one Pallas kernel.

    Returns packed logits [N, out_pad] in bf16; per-head slices taken by the caller.
    """
    n, latent = x.shape
    weights = fused["weights"]
    biases = fused["biases"]
    layer_kinds = fused["layer_kinds"]
    num_heads = fused["num_heads"]
    hidden_size = fused["hidden_size"]
    num_linear = len(weights)
    out_cols = weights[-1].shape[-1]

    if n == 0:  # guard: zero-size grid is not supported
        return jnp.zeros((0, out_cols), jnp.bfloat16)

    x = x.astype(jnp.bfloat16)  # halve the x DMA; LHS feeds the MXU natively in bf16

    # --- VMEM budgeting: shrink the row tile until the estimated footprint fits. ---
    param_bytes = sum(int(w.size) * w.dtype.itemsize for w in weights) + \
                  sum(int(b.size) * b.dtype.itemsize for b in biases)
    widths = [latent]
    for w, k in zip(weights, layer_kinds):
        widths.append(w.shape[-1] if k == "dense" else num_heads * hidden_size)
    max_width = max(widths)

    budget = 40 * 1024 * 1024                 # conservative: fits v7x 64 MiB/TC
    max_row_tile = max(8, _round_up(max_row_tile, 8))
    while True:
        # Adaptive row tile: minimize tail padding (e.g. n=520 -> tile 264, not 512).
        row_tile = _round_up(pl.cdiv(n, pl.cdiv(n, max_row_tile)), 8)
        row_tile = min(row_tile, max_row_tile)
        act_bytes = row_tile * max_width * (2 * 4 + 2)  # f32 acc (x2 live) + bf16 copy
        est = (2 * param_bytes                          # weights/biases (double-buffered)
               + 2 * row_tile * latent * 2              # x block (bf16, double-buffered)
               + 2 * row_tile * out_cols * 2            # out block (bf16, double-buffered)
               + act_bytes)
        if est <= budget or max_row_tile <= 8:
            break
        max_row_tile = max(8, max_row_tile // 2)

    n_pad = _round_up(n, row_tile)
    if n_pad != n:
        x = jnp.pad(x, ((0, n_pad - n), (0, 0)))

    inputs = [x]
    in_specs = [pl.BlockSpec((row_tile, latent), lambda i: (i, 0))]
    for w, b in zip(weights, biases):
        inputs += [w, b]
        # Grid-invariant operands (constant index_map): the pipeline keeps the same
        # VMEM block resident across grid steps instead of re-copying it.
        in_specs += [
            pl.BlockSpec(w.shape, _const_index_map(w.ndim)),
            pl.BlockSpec(b.shape, _const_index_map(b.ndim)),
        ]

    # Cost estimate so XLA can schedule/overlap this call with surrounding ops.
    flops = 0
    in_dim = latent
    for w, k in zip(weights, layer_kinds):
        if k == "dense":
            flops += 2 * n_pad * in_dim * int(w.shape[-1])
            in_dim = int(w.shape[-1])
        else:
            flops += 2 * n_pad * num_heads * hidden_size * hidden_size
            in_dim = num_heads * hidden_size
    bytes_accessed = n_pad * latent * 2 + param_bytes + n_pad * out_cols * 2
    cost = pl.CostEstimate(flops=int(flops), transcendentals=0,
                           bytes_accessed=int(bytes_accessed))

    vmem_limit = int(min(max(4 * est, 16 * 1024 * 1024), 48 * 1024 * 1024))

    kernel = _make_fused_kernel(layer_kinds, num_heads, hidden_size)
    out = pl.pallas_call(
        kernel,
        out_shape=jax.ShapeDtypeStruct((n_pad, out_cols), jnp.bfloat16),
        grid=(n_pad // row_tile,),
        in_specs=in_specs,
        out_specs=pl.BlockSpec((row_tile, out_cols), lambda i: (i, 0)),
        compiler_params=pltpu.CompilerParams(
            dimension_semantics=("parallel",),
            vmem_limit_bytes=vmem_limit,
        ),
        cost_estimate=cost,
    )(*inputs)
    return out[:n]


# ---------------------------------------------------------------------------
# Parameter construction (mimics nn.Linear default init + fresh eval-mode BN),
# plus packing/folding into the fused layout.
# ---------------------------------------------------------------------------
def init_mol_decoder_params(key, latent_size, hidden_size, mlp_layers, use_bn):
    """Per-head (unfused, unfolded) f32 parameters, used for packing and reference."""
    vocab_sizes = get_atom_feature_dims()
    heads = []
    for vocab in vocab_sizes:
        layer_sizes = [hidden_size] * mlp_layers + [vocab]
        in_dim = latent_size
        weights, biases, scales, shifts = [], [], [], []
        for li, out_dim in enumerate(layer_sizes):
            is_last = li == len(layer_sizes) - 1
            key, kw, kb = jax.random.split(key, 3)
            bound = 1.0 / jnp.sqrt(jnp.float32(in_dim))
            w = jax.random.uniform(
                kw, (in_dim, out_dim), jnp.float32, minval=-bound, maxval=bound)
            b = jax.random.uniform(
                kb, (1, out_dim), jnp.float32, minval=-bound, maxval=bound)
            weights.append(w)
            biases.append(b)
            if not is_last:
                if use_bn:
                    # Fresh BatchNorm1d in eval: gamma=1, beta=0, mean=0, var=1, eps=1e-5
                    eps = 1e-5
                    gamma = jnp.ones((1, out_dim), jnp.float32)
                    beta = jnp.zeros((1, out_dim), jnp.float32)
                    running_mean = jnp.zeros((1, out_dim), jnp.float32)
                    running_var = jnp.ones((1, out_dim), jnp.float32)
                    scale = gamma / jnp.sqrt(running_var + eps)
                    shift = beta - running_mean * scale
                else:
                    scale = jnp.ones((1, out_dim), jnp.float32)
                    shift = jnp.zeros((1, out_dim), jnp.float32)
                scales.append(scale)
                shifts.append(shift)
            in_dim = out_dim
        heads.append(dict(weights=weights, biases=biases, bn_scales=scales,
                          bn_shifts=shifts, vocab=vocab))
    return heads


def pack_fused_params(heads, latent_size, hidden_size, mlp_layers, lane_align=128):
    """Fold BN affines into the linears and pack all heads into one fused MLP.

    Weights are stored in bf16 (MXU-native); biases stay f32.
    """
    num_heads = len(heads)
    vocabs = [h["vocab"] for h in heads]
    offsets, off = [], 0
    for v in vocabs:
        offsets.append(off)
        off += v
    out_pad = _round_up(off, 128)

    # Grouped middle layers avoid the 9x block-diagonal FLOP/weight blowup once a
    # single head already fills an MXU tile; requires lane-aligned per-head slices.
    grouped = hidden_size >= 128 and hidden_size % 128 == 0 and mlp_layers > 1
    hid_tot = num_heads * hidden_size
    hid_pad = hid_tot if grouped else _round_up(hid_tot, lane_align)

    fused_weights, fused_biases, layer_kinds = [], [], []

    def fold(head, li):
        w, b = head["weights"][li], head["biases"][li]
        if li < len(head["bn_scales"]):
            s, t = head["bn_scales"][li], head["bn_shifts"][li]
            return w * s, b * s + t
        return w, b

    # Layer 0: concat along output -> [latent, hid_pad]
    W0 = jnp.zeros((latent_size, hid_pad), jnp.float32)
    B0 = jnp.zeros((1, hid_pad), jnp.float32)
    for hi, head in enumerate(heads):
        w, b = fold(head, 0)
        c0 = hi * hidden_size
        W0 = W0.at[:, c0:c0 + hidden_size].set(w)
        B0 = B0.at[:, c0:c0 + hidden_size].set(b)
    fused_weights.append(W0.astype(jnp.bfloat16))
    fused_biases.append(B0)
    layer_kinds.append("dense")

    # Middle hidden layers
    for li in range(1, mlp_layers):
        if grouped:
            Ws, Bs = [], []
            for head in heads:
                w, b = fold(head, li)
                Ws.append(w)
                Bs.append(b)
            Wm = jnp.stack(Ws, axis=0)            # [num_heads, hidden, hidden]
            Bm = jnp.concatenate(Bs, axis=1)      # [1, hid_tot]
            layer_kinds.append("grouped")
        else:
            Wm = jnp.zeros((hid_pad, hid_pad), jnp.float32)
            Bm = jnp.zeros((1, hid_pad), jnp.float32)
            for hi, head in enumerate(heads):
                w, b = fold(head, li)
                r0 = hi * hidden_size
                Wm = Wm.at[r0:r0 + hidden_size, r0:r0 + hidden_size].set(w)
                Bm = Bm.at[:, r0:r0 + hidden_size].set(b)
            layer_kinds.append("dense")
        fused_weights.append(Wm.astype(jnp.bfloat16))
        fused_biases.append(Bm)

    # Final layer: packed logits, lane-padded to a multiple of 128.
    Wl = jnp.zeros((hid_pad, out_pad), jnp.float32)
    Bl = jnp.zeros((1, out_pad), jnp.float32)
    for hi, head in enumerate(heads):
        w, b = head["weights"][-1], head["biases"][-1]
        r0 = hi * hidden_size
        c0 = offsets[hi]
        v = head["vocab"]
        Wl = Wl.at[r0:r0 + hidden_size, c0:c0 + v].set(w)
        Bl = Bl.at[:, c0:c0 + v].set(b)
    fused_weights.append(Wl.astype(jnp.bfloat16))
    fused_biases.append(Bl)
    layer_kinds.append("dense")

    return dict(weights=fused_weights, biases=fused_biases, layer_kinds=layer_kinds,
                offsets=offsets, vocabs=vocabs, out_pad=out_pad,
                num_heads=num_heads, hidden_size=hidden_size)


def mol_decoder_forward(fused, x, mode=None, max_row_tile=512, return_packed=False):
    """Forward of MolDecoder. Returns a list of [N, vocab_i] logits (bf16), or the
    packed [N, out_pad] array + offsets/vocabs when return_packed=True (preferred:
    avoids 9 narrow, lane-sparse HBM slice copies)."""
    if mode is not None and str(mode).lower() in ("train", "training"):
        raise NotImplementedError(
            "fused MolDecoder kernel implements eval/inference semantics only")
    packed = fused_mol_decoder_call(fused, x, max_row_tile=max_row_tile)
    if return_packed:
        return packed, fused["offsets"], fused["vocabs"]
    # NOTE: keep these slices inside the consumer's jit so XLA fuses them.
    return [packed[:, o:o + v] for o, v in zip(fused["offsets"], fused["vocabs"])]


# ---------------------------------------------------------------------------
# References
# ---------------------------------------------------------------------------
def _reference_forward_f32(heads, x):
    """Original module semantics, full f32."""
    attrs = []
    for head in heads:
        h = x
        nl = len(head["weights"])
        for i in range(nl):
            h = h @ head["weights"][i] + head["biases"][i]
            if i < nl - 1:
                h = h * head["bn_scales"][i] + head["bn_shifts"][i]
                h = jnp.maximum(h, 0.0)
        attrs.append(h)
    return attrs


def _reference_forward_bf16(heads, x):
    """Mirror the kernel's dtype strategy: bf16 weights/activations, f32 accumulate."""
    attrs = []
    xb = x.astype(jnp.bfloat16)
    for head in heads:
        h = xb
        nl = len(head["weights"])
        for i in range(nl):
            if i < nl - 1:
                s, t = head["bn_scales"][i], head["bn_shifts"][i]
                w = (head["weights"][i] * s).astype(jnp.bfloat16)
                b = head["biases"][i] * s + t
            else:
                w = head["weights"][i].astype(jnp.bfloat16)
                b = head["biases"][i]
            acc = jnp.dot(h.astype(jnp.float32), w.astype(jnp.float32)) + b
            if i < nl - 1:
                h = jnp.maximum(acc, 0.0).astype(jnp.bfloat16)
            else:
                h = acc.astype(jnp.bfloat16)
        attrs.append(h.astype(jnp.float32))
    return attrs


if __name__ == "__main__":
    vocab_sizes = get_atom_feature_dims()
    key = jax.random.PRNGKey(0)

    # ----- Test 1: small hidden -> fused block-diagonal middle layers -----
    latent_size, hidden_size, mlp_layers, use_bn = 32, 32, 2, True
    n_nodes = 10  # deliberately not a multiple of the row tile
    key, kx, kp = jax.random.split(key, 3)
    x = jax.random.normal(kx, (n_nodes, latent_size), jnp.float32)
    heads = init_mol_decoder_params(kp, latent_size, hidden_size, mlp_layers, use_bn)
    fused = pack_fused_params(heads, latent_size, hidden_size, mlp_layers)

    outs = mol_decoder_forward(fused, x, mode=None)
    outs = [jax.block_until_ready(o) for o in outs]
    refs_bf16 = _reference_forward_bf16(heads, x)
    refs_f32 = _reference_forward_f32(heads, x)
    assert len(outs) == len(vocab_sizes)
    for o, rb, rf, v in zip(outs, refs_bf16, refs_f32, vocab_sizes):
        assert o.shape == (n_nodes, v), o.shape
        of = o.astype(jnp.float32)
        assert jnp.allclose(of, rb, atol=2e-2, rtol=2e-2), \
            float(jnp.max(jnp.abs(of - rb)))
        assert jnp.allclose(of, rf, atol=1e-1, rtol=1e-1), \
            float(jnp.max(jnp.abs(of - rf)))

    # ----- Test 2: hidden >= 128 -> grouped per-head middle layers -----
    latent_size2, hidden_size2, mlp_layers2 = 32, 128, 3
    n_nodes2 = 20
    key, kx2, kp2 = jax.random.split(key, 3)
    x2 = jax.random.normal(kx2, (n_nodes2, latent_size2), jnp.float32)
    heads2 = init_mol_decoder_params(kp2, latent_size2, hidden_size2, mlp_layers2, True)
    fused2 = pack_fused_params(heads2, latent_size2, hidden_size2, mlp_layers2)
    assert any(k == "grouped" for k in fused2["layer_kinds"])

    outs2 = mol_decoder_forward(fused2, x2, mode=None)
    outs2 = [jax.block_until_ready(o) for o in outs2]
    refs2 = _reference_forward_bf16(heads2, x2)
    for o, r, v in zip(outs2, refs2, vocab_sizes):
        assert o.shape == (n_nodes2, v), o.shape
        of = o.astype(jnp.float32)
        assert jnp.allclose(of, r, atol=2e-2, rtol=2e-2), \
            float(jnp.max(jnp.abs(of - r)))

    # ----- n = 0 guard -----
    empty = mol_decoder_forward(fused, jnp.zeros((0, latent_size), jnp.float32))
    assert all(e.shape == (0, v) for e, v in zip(empty, vocab_sizes))

    print("KERNEL_OK")
</pallas_src>

<mosaic_0001>
module attributes {stable_mosaic.version = 11 : i64} {
  func.func @kernel(%arg0: i32, %arg1: memref<16x32xbf16, #tpu.memory_space<vmem>>, %arg2: memref<32x384xbf16, #tpu.memory_space<vmem>>, %arg3: memref<1x384xf32, #tpu.memory_space<vmem>>, %arg4: memref<384x384xbf16, #tpu.memory_space<vmem>>, %arg5: memref<1x384xf32, #tpu.memory_space<vmem>>, %arg6: memref<384x256xbf16, #tpu.memory_space<vmem>>, %arg7: memref<1x256xf32, #tpu.memory_space<vmem>>, %arg8: memref<16x256xbf16, #tpu.memory_space<vmem>>) attributes {dimension_semantics = [#tpu.dimension_semantics<parallel>], iteration_bounds = array<i64: 1>, scalar_prefetch = 0 : i64, scratch_operands = 0 : i64, tpu.core_type = #tpu.core_type<tc>, window_params = [{transform_indices = @transform_0, window_bounds = array<i64: 16, 32>}, {pipeline_mode = #tpu.pipeline_mode<synchronous>, transform_indices = @transform_1, window_bounds = array<i64: 32, 384>}, {pipeline_mode = #tpu.pipeline_mode<synchronous>, transform_indices = @transform_2, window_bounds = array<i64: 1, 384>}, {pipeline_mode = #tpu.pipeline_mode<synchronous>, transform_indices = @transform_3, window_bounds = array<i64: 384, 384>}, {pipeline_mode = #tpu.pipeline_mode<synchronous>, transform_indices = @transform_4, window_bounds = array<i64: 1, 384>}, {pipeline_mode = #tpu.pipeline_mode<synchronous>, transform_indices = @transform_5, window_bounds = array<i64: 384, 256>}, {pipeline_mode = #tpu.pipeline_mode<synchronous>, transform_indices = @transform_6, window_bounds = array<i64: 1, 256>}, {transform_indices = @transform_7, window_bounds = array<i64: 16, 256>}]} {
    %c0 = arith.constant 0 : index
    %c0_0 = arith.constant 0 : index
    %0 = vector.load %arg1[%c0, %c0_0] : memref<16x32xbf16, #tpu.memory_space<vmem>>, vector<16x32xbf16>
    %c0_1 = arith.constant 0 : index
    %c0_2 = arith.constant 0 : index
    %1 = vector.load %arg3[%c0_1, %c0_2] : memref<1x384xf32, #tpu.memory_space<vmem>>, vector<1x384xf32>
    %c0_3 = arith.constant 0 : index
    %c0_4 = arith.constant 0 : index
    %2 = vector.load %arg2[%c0_3, %c0_4] : memref<32x384xbf16, #tpu.memory_space<vmem>>, vector<32x384xbf16>
    %cst = arith.constant dense<0.000000e+00> : vector<16x384xf32>
    %3 = tpu.matmul %0, %2, %cst {dimension_numbers = #tpu.dot_dimension_numbers<[1], [0], [0], [1], [0, 0, 1, 1], [], []>} : vector<16x32xbf16>, vector<32x384xbf16>, vector<16x384xf32> -> vector<16x384xf32>
    %4 = vector.broadcast %1 : vector<1x384xf32> to vector<16x384xf32>
    %5 = arith.addf %3, %4 : vector<16x384xf32>
    %cst_5 = arith.constant 0.000000e+00 : f32
    %6 = vector.broadcast %cst_5 : f32 to vector<16x384xf32>
    %7 = arith.maximumf %5, %6 : vector<16x384xf32>
    %8 = arith.truncf %7 : vector<16x384xf32> to vector<16x384xbf16>
    %c0_6 = arith.constant 0 : index
    %c0_7 = arith.constant 0 : index
    %9 = vector.load %arg5[%c0_6, %c0_7] : memref<1x384xf32, #tpu.memory_space<vmem>>, vector<1x384xf32>
    %c0_8 = arith.constant 0 : index
    %c0_9 = arith.constant 0 : index
    %10 = vector.load %arg4[%c0_8, %c0_9] : memref<384x384xbf16, #tpu.memory_space<vmem>>, vector<384x384xbf16>
    %cst_10 = arith.constant dense<0.000000e+00> : vector<16x384xf32>
    %11 = tpu.matmul %8, %10, %cst_10 {dimension_numbers = #tpu.dot_dimension_numbers<[1], [0], [0], [1], [0, 0, 1, 1], [], []>} : vector<16x384xbf16>, vector<384x384xbf16>, vector<16x384xf32> -> vector<16x384xf32>
    %12 = vector.broadcast %9 : vector<1x384xf32> to vector<16x384xf32>
    %13 = arith.addf %11, %12 : vector<16x384xf32>
    %cst_11 = arith.constant 0.000000e+00 : f32
    %14 = vector.broadcast %cst_11 : f32 to vector<16x384xf32>
    %15 = arith.maximumf %13, %14 : vector<16x384xf32>
    %16 = arith.truncf %15 : vector<16x384xf32> to vector<16x384xbf16>
    %c0_12 = arith.constant 0 : index
    %c0_13 = arith.constant 0 : index
    %17 = vector.load %arg7[%c0_12, %c0_13] : memref<1x256xf32, #tpu.memory_space<vmem>>, vector<1x256xf32>
    %c0_14 = arith.constant 0 : index
    %c0_15 = arith.constant 0 : index
    %18 = vector.load %arg6[%c0_14, %c0_15] : memref<384x256xbf16, #tpu.memory_space<vmem>>, vector<384x256xbf16>
    %cst_16 = arith.constant dense<0.000000e+00> : vector<16x256xf32>
    %19 = tpu.matmul %16, %18, %cst_16 {dimension_numbers = #tpu.dot_dimension_numbers<[1], [0], [0], [1], [0, 0, 1, 1], [], []>} : vector<16x384xbf16>, vector<384x256xbf16>, vector<16x256xf32> -> vector<16x256xf32>
    %20 = vector.broadcast %17 : vector<1x256xf32> to vector<16x256xf32>
    %21 = arith.addf %19, %20 : vector<16x256xf32>
    %22 = arith.truncf %21 : vector<16x256xf32> to vector<16x256xbf16>
    %c0_17 = arith.constant 0 : index
    %c0_18 = arith.constant 0 : index
    %23 = vector.load %arg8[%c0_17, %c0_18] : memref<16x256xbf16, #tpu.memory_space<vmem>>, vector<16x256xbf16>
    tpu.vector_store %arg8[%c0_17, %c0_18], %22 {strides = array<i32>} : memref<16x256xbf16, #tpu.memory_space<vmem>>, vector<16x256xbf16>,
    return
  }
  func.func @transform_0(%arg0: i32) -> (i32, i32) {
    %c0_i32 = arith.constant 0 : i32
    %c0_i32_0 = arith.constant 0 : i32
    return %arg0, %c0_i32 : i32, i32
  }
  func.func @transform_1(%arg0: i32) -> (i32, i32) {
    %c0_i32 = arith.constant 0 : i32
    %c0_i32_0 = arith.constant 0 : i32
    %c0_i32_1 = arith.constant 0 : i32
    return %c0_i32, %c0_i32_0 : i32, i32
  }
  func.func @transform_2(%arg0: i32) -> (i32, i32) {
    %c0_i32 = arith.constant 0 : i32
    %c0_i32_0 = arith.constant 0 : i32
    %c0_i32_1 = arith.constant 0 : i32
    return %c0_i32, %c0_i32_0 : i32, i32
  }
  func.func @transform_3(%arg0: i32) -> (i32, i32) {
    %c0_i32 = arith.constant 0 : i32
    %c0_i32_0 = arith.constant 0 : i32
    %c0_i32_1 = arith.constant 0 : i32
    return %c0_i32, %c0_i32_0 : i32, i32
  }
  func.func @transform_4(%arg0: i32) -> (i32, i32) {
    %c0_i32 = arith.constant 0 : i32
    %c0_i32_0 = arith.constant 0 : i32
    %c0_i32_1 = arith.constant 0 : i32
    return %c0_i32, %c0_i32_0 : i32, i32
  }
  func.func @transform_5(%arg0: i32) -> (i32, i32) {
    %c0_i32 = arith.constant 0 : i32
    %c0_i32_0 = arith.constant 0 : i32
    %c0_i32_1 = arith.constant 0 : i32
    return %c0_i32, %c0_i32_0 : i32, i32
  }
  func.func @transform_6(%arg0: i32) -> (i32, i32) {
    %c0_i32 = arith.constant 0 : i32
    %c0_i32_0 = arith.constant 0 : i32
    %c0_i32_1 = arith.constant 0 : i32
    return %c0_i32, %c0_i32_0 : i32, i32
  }
  func.func @transform_7(%arg0: i32) -> (i32, i32) {
    %c0_i32 = arith.constant 0 : i32
    %c0_i32_0 = arith.constant 0 : i32
    return %arg0, %c0_i32 : i32, i32
  }
}

</mosaic_0001>

<llo_original>
// kernel: tpu_custom_call.1
$region0: #{tpu_custom_call.1}
  #allocation0 [shape = 'u32[]', space=smem, size = 0x4, offset = 0x4, fixed_abs, tag = 'smem constant byte address 0x4 - core index']
  #allocation1 [shape = 'u32[72,128]{1,0:T(1,128)}', space=vmem, size = 0x9000, scoped, tag = 'internal scratch']
  %s0 = inlined_call_operand.hbm [shape: bf16[16,32], index: 0, kind: input, shape index: {}]
  %s1 = inlined_call_operand.hbm [shape: bf16[32,384], index: 1, kind: input, shape index: {}]
  %s2 = inlined_call_operand.hbm [shape: f32[1,384], index: 2, kind: input, shape index: {}]
  %s3 = inlined_call_operand.hbm [shape: bf16[384,384], index: 3, kind: input, shape index: {}]
  %s4 = inlined_call_operand.vmem [shape: f32[1,384], index: 4, kind: input, shape index: {}]
  %s5 = inlined_call_operand.hbm [shape: bf16[384,256], index: 5, kind: input, shape index: {}]
  %s6 = inlined_call_operand.vmem [shape: f32[1,256], index: 6, kind: input, shape index: {}]
  %s7 = inlined_call_operand.hbm [shape: bf16[16,256], index: 7, kind: output, shape index: {}]
  %s8 = sld [smem:[#allocation0]]
  $region58: #{tpu_custom_call.1} parent=0
    _
  %s10 = ssub.s32 1, %s8
  %s11 = scalar_select 0, %s10, %s8
  $region1: #{tpu_custom_call.1} parent=0
    #allocation2 [shape = 'u8[4096]{0}', space=vmem, size = 0x1000, scoped, tag = 'input window, operand 0, single buffered']
    #allocation3 [shape = 's32[1]{0}', space=sflag, size = 0x4, scoped, tag = 'scoped memory for tpu_custom_call.1']
    #allocation4 [shape = 's32[1]{0}', space=sflag, size = 0x4, scoped, tag = 'scoped memory for tpu_custom_call.1']
    #allocation5 [shape = 'u8[24576]{0}', space=vmem, size = 0x6000, scoped, tag = 'input window, operand 1, single buffered']
    #allocation6 [shape = 's32[1]{0}', space=sflag, size = 0x4, scoped, tag = 'scoped memory for tpu_custom_call.1']
    #allocation7 [shape = 'u8[1536]{0}', space=vmem, size = 0x800, scoped, tag = 'input window, operand 2, single buffered']
    #allocation8 [shape = 'u8[294912]{0}', space=vmem, size = 0x48000, scoped, tag = 'input window, operand 3, single buffered']
    #allocation9 [shape = 's32[1]{0}', space=sflag, size = 0x4, scoped, tag = 'scoped memory for tpu_custom_call.1']
    #allocation10 [shape = 'u8[196608]{0}', space=vmem, size = 0x30000, scoped, tag = 'input window, operand 5, single buffered']
    #allocation11 [shape = 'u8[8192]{0}', space=vmem, size = 0x2000, scoped, tag = 'output window, operand 0, single buffered']
    %12 = vsyncpa [#allocation3], 0
    %13 = vsyncpa [#allocation6], 0
    %14 = vsyncpa [#allocation9], 0
    %15 = vsyncpa [#allocation4], 0
    // Predicated region
    $region2: #{tpu_custom_call.1} parent=1 // pred_check
      _
    $region3: #{tpu_custom_call.1} parent=1 // pred_check_branch
      %17 = sbr.rel (0) target = $region5
    $region4: #{tpu_custom_call.1} parent=1 // pred_region
      %19 = vsyncadd [#allocation3], 0
      %s20 = sshll.u32 %s0, 4
      %s21 = int_to_ptr.hbm [resolvable:$true] %s20
      %s22 = sshll.u32 [#allocation2], 4
      %s23 = int_to_ptr.vmem [resolvable:$true] %s22
      %28 = dma.hbm_to_vmem [thread:$0]  %s21, 128, %s23, [#allocation3], 64, 64, 4
    $region5: #{tpu_custom_call.1} parent=1 // pred_fallthru
      _
    // Predicated region
    $region6: #{tpu_custom_call.1} parent=1 // pred_check
      _
    $region7: #{tpu_custom_call.1} parent=1 // pred_check_branch
      %30 = sbr.rel (0) target = $region9
    $region8: #{tpu_custom_call.1} parent=1 // pred_region
      %32 = vsyncadd [#allocation6], 0
      %s33 = sshll.u32 %s1, 4
      %s34 = int_to_ptr.hbm [resolvable:$true] %s33
      %s35 = sshll.u32 [#allocation5], 4
      %s36 = int_to_ptr.vmem [resolvable:$true] %s35
      %41 = dma.hbm_to_vmem [thread:$0]  %s34, 768, %s36, [#allocation6], 192, 192, 12
    $region9: #{tpu_custom_call.1} parent=1 // pred_fallthru
      _
    // Predicated region
    $region10: #{tpu_custom_call.1} parent=1 // pred_check
      _
    $region11: #{tpu_custom_call.1} parent=1 // pred_check_branch
      %43 = sbr.rel (0) target = $region13
    $region12: #{tpu_custom_call.1} parent=1 // pred_region
      %45 = vsyncadd [#allocation6], 0
      %s47 = sshll.u32 %s2, 4
      %s48 = int_to_ptr.hbm [resolvable:$true] %s47
      %s49 = sshll.u32 [#allocation7], 4
      %s50 = int_to_ptr.vmem [resolvable:$true] %s49
      %52 = dma.hbm_to_vmem [thread:$0]  %s48, 48, %s50, [#allocation6]
    $region13: #{tpu_custom_call.1} parent=1 // pred_fallthru
      _
    // Predicated region
    $region14: #{tpu_custom_call.1} parent=1 // pred_check
      _
    $region15: #{tpu_custom_call.1} parent=1 // pred_check_branch
      %54 = sbr.rel (0) target = $region17
    $region16: #{tpu_custom_call.1} parent=1 // pred_region
      %56 = vsyncadd [#allocation9], 0
      %s57 = sshll.u32 %s3, 4
      %s58 = int_to_ptr.hbm [resolvable:$true] %s57
      %s59 = sshll.u32 [#allocation8], 4
      %s60 = int_to_ptr.vmem [resolvable:$true] %s59
      %65 = dma.hbm_to_vmem [thread:$0]  %s58, 9216, %s60, [#allocation9], 192, 192, 12
    $region17: #{tpu_custom_call.1} parent=1 // pred_fallthru
      _
    // Predicated region
    $region18: #{tpu_custom_call.1} parent=1 // pred_check
      _
    $region19: #{tpu_custom_call.1} parent=1 // pred_check_branch
      %67 = sbr.rel (0) target = $region21
    $region20: #{tpu_custom_call.1} parent=1 // pred_region
      _
    $region21: #{tpu_custom_call.1} parent=1 // pred_fallthru
      _
    // Predicated region
    $region22: #{tpu_custom_call.1} parent=1 // pred_check
      _
    $region23: #{tpu_custom_call.1} parent=1 // pred_check_branch
      %69 = sbr.rel (0) target = $region25
    $region24: #{tpu_custom_call.1} parent=1 // pred_region
      %71 = vsyncadd [#allocation9], 0
      %s72 = sshll.u32 %s5, 4
      %s73 = int_to_ptr.hbm [resolvable:$true] %s72
      %s74 = sshll.u32 [#allocation10], 4
      %s75 = int_to_ptr.vmem [resolvable:$true] %s74
      %80 = dma.hbm_to_vmem [thread:$0]  %s73, 6144, %s75, [#allocation9], 128, 128, 8
    $region25: #{tpu_custom_call.1} parent=1 // pred_fallthru
      _
    // Predicated region
    $region26: #{tpu_custom_call.1} parent=1 // pred_check
      _
    $region27: #{tpu_custom_call.1} parent=1 // pred_check_branch
      %82 = sbr.rel (0) target = $region29
    $region28: #{tpu_custom_call.1} parent=1 // pred_region
      _
    $region29: #{tpu_custom_call.1} parent=1 // pred_fallthru
      _
    // Predicated region
    $region30: #{tpu_custom_call.1} parent=1 // pred_check
      _
    $region31: #{tpu_custom_call.1} parent=1 // pred_check_branch
      %84 = sbr.rel (0) target = $region33
    $region32: #{tpu_custom_call.1} parent=1 // pred_region
      %86 = dma.done [#allocation3], 128
    $region33: #{tpu_custom_call.1} parent=1 // pred_fallthru
      _
    // Predicated region
    $region34: #{tpu_custom_call.1} parent=1 // pred_check
      _
    $region35: #{tpu_custom_call.1} parent=1 // pred_check_branch
      %88 = sbr.rel (0) target = $region37
    $region36: #{tpu_custom_call.1} parent=1 // pred_region
      %90 = dma.done [#allocation6], 768
    $region37: #{tpu_custom_call.1} parent=1 // pred_fallthru
      _
    // Predicated region
    $region38: #{tpu_custom_call.1} parent=1 // pred_check
      _
    $region39: #{tpu_custom_call.1} parent=1 // pred_check_branch
      %92 = sbr.rel (0) target = $region41
    $region40: #{tpu_custom_call.1} parent=1 // pred_region
      %94 = dma.done [#allocation6], 48
    $region41: #{tpu_custom_call.1} parent=1 // pred_fallthru
      _
    // Predicated region
    $region42: #{tpu_custom_call.1} parent=1 // pred_check
      _
    $region43: #{tpu_custom_call.1} parent=1 // pred_check_branch
      %96 = sbr.rel (0) target = $region45
    $region44: #{tpu_custom_call.1} parent=1 // pred_region
      %98 = dma.done [#allocation9], 9216
    $region45: #{tpu_custom_call.1} parent=1 // pred_fallthru
      _
    // Predicated region
    $region46: #{tpu_custom_call.1} parent=1 // pred_check
      _
    $region47: #{tpu_custom_call.1} parent=1 // pred_check_branch
      %100 = sbr.rel (0) target = $region49
    $region48: #{tpu_custom_call.1} parent=1 // pred_region
      %102 = dma.done [#allocation9], 6144
    $region49: #{tpu_custom_call.1} parent=1 // pred_fallthru
      _
    %v104 = vld [vmem:[#allocation2] sm:$0xf]
    %v105 = vld [vmem:[#allocation2 + $0x4] sm:$0xf]
    %v106 = vld [vmem:[#allocation7] sm:$0x7]
    %v107 = vld [vmem:[#allocation5] sm:$0xff]
    %v108 = vld [vmem:[#allocation5 + $0x8] sm:$0xf]
    %v109 = vld [vmem:[#allocation5 + $0xc] sm:$0xff]
    %v110 = vld [vmem:[#allocation5 + $0x14] sm:$0xf]
    %v111 = vld [vmem:[#allocation5 + $0x18] sm:$0xff]
    %v112 = vld [vmem:[#allocation5 + $0x20] sm:$0xf]
    %v113 = vld [vmem:[#allocation5 + $0x24] sm:$0xff]
    %v114 = vld [vmem:[#allocation5 + $0x2c] sm:$0xf]
    %v116 = vperm.slane %v106, 0
    %v117 = vperm.slane %v106, 1
    %v118 = vperm.slane %v106, 2
    %v124 = vunpack.c.l.b16 %v104
    %v125 = vunpack.c.l.b16 %v105
    %v126 = vpack.c.b16 %v125, %v124
    %v135 = vunpack.c.l.b16 %v107
    %v136 = vunpack.c.h.b16 %v107
    %v137 = vunpack.c.l.b16 %v108
    %v138 = vunpack.c.l.b16 %v109
    %v139 = vunpack.c.h.b16 %v109
    %v140 = vunpack.c.l.b16 %v110
    %v141 = vunpack.c.l.b16 %v111
    %v142 = vunpack.c.h.b16 %v111
    %v143 = vunpack.c.l.b16 %v112
    %v144 = vunpack.c.l.b16 %v113
    %v145 = vunpack.c.h.b16 %v113
    %v146 = vunpack.c.l.b16 %v114
    %v147 = vpack.c.b16 %v138, %v135
    %v148 = vpack.c.b16 %v139, %v136
    %v149 = vpack.c.b16 %v140, %v137
    %v150 = vpack.c.b16 %v144, %v141
    %v151 = vpack.c.b16 %v145, %v142
    %v152 = vpack.c.b16 %v146, %v143
    %vm159 = vcmask 261120
    %v161 = vsel %vm159, %v126, 0
    %163 = vmatpush.bf16.msra.mxu0 0
    %164 = vmatpush.bf16.msra.mxu0 0
    %165 = vmatpush.bf16.msra.mxu0 0
    %166 = vmatpush.bf16.msra.mxu0 0
    %167 = vmatpush.bf16.msra.mxu0 0
    %168 = vmatpush.bf16.msra.mxu0 0
    %169 = vmatpush.bf16.msra.mxu0 %v150
    %170 = vmatpush.bf16.msra.mxu0 %v147
    %171 = vmatmul.bf16.gmra.mxu0 %v161
    %v172 = vpop.f32.mrf.mxu0
    %v173 = vadd.f32 %v116, %v172
    %v174 = vpop.f32.mrf.mxu0
    %v175 = vadd.f32 %v116, %v174
    %176 = vdwg.mxu0
    %177 = vmatpush.bf16.msra.mxu0 0
    %178 = vmatpush.bf16.msra.mxu0 0
    %179 = vmatpush.bf16.msra.mxu0 0
    %180 = vmatpush.bf16.msra.mxu0 0
    %181 = vmatpush.bf16.msra.mxu0 0
    %182 = vmatpush.bf16.msra.mxu0 0
    %183 = vmatpush.bf16.msra.mxu0 %v151
    %184 = vmatpush.bf16.msra.mxu0 %v148
    %185 = vmatmul.bf16.gmra.mxu0 %v161
    %v186 = vpop.f32.mrf.mxu0
    %v187 = vadd.f32 %v117, %v186
    %v188 = vpop.f32.mrf.mxu0
    %v189 = vadd.f32 %v117, %v188
    %190 = vdwg.mxu0
    %191 = vmatpush.bf16.msra.mxu0 0
    %192 = vmatpush.bf16.msra.mxu0 0
    %193 = vmatpush.bf16.msra.mxu0 0
    %194 = vmatpush.bf16.msra.mxu0 0
    %195 = vmatpush.bf16.msra.mxu0 0
    %196 = vmatpush.bf16.msra.mxu0 0
    %197 = vmatpush.bf16.msra.mxu0 %v152
    %198 = vmatpush.bf16.msra.mxu0 %v149
    %199 = vmatmul.bf16.gmra.mxu0 %v161
    %v200 = vpop.f32.mrf.mxu0
    %v201 = vadd.f32 %v118, %v200
    %v202 = vpop.f32.mrf.mxu0
    %v203 = vadd.f32 %v118, %v202
    %204 = vdwg.mxu0
    %v205 = vmax.f32 %v173, 0.0
    %v206 = vmax.f32 %v187, 0.0
    %v207 = vmax.f32 %v201, 0.0
    %v208 = vmax.f32 %v175, 0.0
    %v209 = vmax.f32 %v189, 0.0
    %v210 = vmax.f32 %v203, 0.0
    %v211 = vpack.c.bf16 %v208, %v205
    %v212 = vpack.c.bf16 %v209, %v206
    %v213 = vpack.c.bf16 %v210, %v207
    %v214 = vld [vmem:[%s4] sm:$0x7]
    %v215 = vld [vmem:[#allocation8] sm:$0xff]
    %v216 = vld [vmem:[#allocation8 + $0x8] sm:$0xf]
    %v217 = vld [vmem:[#allocation8 + $0xc] sm:$0xff]
    %v218 = vld [vmem:[#allocation8 + $0x14] sm:$0xf]
    %v219 = vld [vmem:[#allocation8 + $0x18] sm:$0xff]
    %v220 = vld [vmem:[#allocation8 + $0x20] sm:$0xf]
    %v221 = vld [vmem:[#allocation8 + $0x24] sm:$0xff]
    %v222 = vld [vmem:[#allocation8 + $0x2c] sm:$0xf]
    %v223 = vld [vmem:[#allocation8 + $0x30] sm:$0xff]
    %v224 = vld [vmem:[#allocation8 + $0x38] sm:$0xf]
    %v225 = vld [vmem:[#allocation8 + $0x3c] sm:$0xff]
    %v226 = vld [vmem:[#allocation8 + $0x44] sm:$0xf]
    %v227 = vld [vmem:[#allocation8 + $0x48] sm:$0xff]
    %v228 = vld [vmem:[#allocation8 + $0x50] sm:$0xf]
    %v229 = vld [vmem:[#allocation8 + $0x54] sm:$0xff]
    %v230 = vld [vmem:[#allocation8 + $0x5c] sm:$0xf]
    %v231 = vld [vmem:[#allocation8 + $0x60] sm:$0xff]
    %v232 = vld [vmem:[#allocation8 + $0x68] sm:$0xf]
    %v233 = vld [vmem:[#allocation8 + $0x6c] sm:$0xff]
    %v234 = vld [vmem:[#allocation8 + $0x74] sm:$0xf]
    %v235 = vld [vmem:[#allocation8 + $0x78] sm:$0xff]
    %v236 = vld [vmem:[#allocation8 + $0x80] sm:$0xf]
    %v237 = vld [vmem:[#allocation8 + $0x84] sm:$0xff]
    %v238 = vld [vmem:[#allocation8 + $0x8c] sm:$0xf]
    %v239 = vld [vmem:[#allocation8 + $0x90] sm:$0xff]
    %v240 = vld [vmem:[#allocation8 + $0x98] sm:$0xf]
    %v241 = vld [vmem:[#allocation8 + $0x9c] sm:$0xff]
    %v242 = vld [vmem:[#allocation8 + $0xa4] sm:$0xf]
    %v243 = vld [vmem:[#allocation8 + $0xa8] sm:$0xff]
    %v244 = vld [vmem:[#allocation8 + $0xb0] sm:$0xf]
    %v245 = vld [vmem:[#allocation8 + $0xb4] sm:$0xff]
    %v246 = vld [vmem:[#allocation8 + $0xbc] sm:$0xf]
    %v247 = vld [vmem:[#allocation8 + $0xc0] sm:$0xff]
    %v248 = vld [vmem:[#allocation8 + $0xc8] sm:$0xf]
    %v249 = vld [vmem:[#allocation8 + $0xcc] sm:$0xff]
    %v250 = vld [vmem:[#allocation8 + $0xd4] sm:$0xf]
    %v251 = vld [vmem:[#allocation8 + $0xd8] sm:$0xff]
    %v252 = vld [vmem:[#allocation8 + $0xe0] sm:$0xf]
    %v253 = vld [vmem:[#allocation8 + $0xe4] sm:$0xff]
    %v254 = vld [vmem:[#allocation8 + $0xec] sm:$0xf]
    %v255 = vld [vmem:[#allocation8 + $0xf0] sm:$0xff]
    %v256 = vld [vmem:[#allocation8 + $0xf8] sm:$0xf]
    %v257 = vld [vmem:[#allocation8 + $0xfc] sm:$0xff]
    %v258 = vld [vmem:[#allocation8 + $0x104] sm:$0xf]
    %v259 = vld [vmem:[#allocation8 + $0x108] sm:$0xff]
    %v260 = vld [vmem:[#allocation8 + $0x110] sm:$0xf]
    %v261 = vld [vmem:[#allocation8 + $0x114] sm:$0xff]
    %v262 = vld [vmem:[#allocation8 + $0x11c] sm:$0xf]
    %v263 = vld [vmem:[#allocation8 + $0x120] sm:$0xff]
    %v264 = vld [vmem:[#allocation8 + $0x128] sm:$0xf]
    %v265 = vld [vmem:[#allocation8 + $0x12c] sm:$0xff]
    %v266 = vld [vmem:[#allocation8 + $0x134] sm:$0xf]
    %v267 = vld [vmem:[#allocation8 + $0x138] sm:$0xff]
    %v268 = vld [vmem:[#allocation8 + $0x140] sm:$0xf]
    %v269 = vld [vmem:[#allocation8 + $0x144] sm:$0xff]
    %v270 = vld [vmem:[#allocation8 + $0x14c] sm:$0xf]
    %v271 = vld [vmem:[#allocation8 + $0x150] sm:$0xff]
    %v272 = vld [vmem:[#allocation8 + $0x158] sm:$0xf]
    %v273 = vld [vmem:[#allocation8 + $0x15c] sm:$0xff]
    %v274 = vld [vmem:[#allocation8 + $0x164] sm:$0xf]
    %v275 = vld [vmem:[#allocation8 + $0x168] sm:$0xff]
    %v276 = vld [vmem:[#allocation8 + $0x170] sm:$0xf]
    %v277 = vld [vmem:[#allocation8 + $0x174] sm:$0xff]
    %v278 = vld [vmem:[#allocation8 + $0x17c] sm:$0xf]
    %v279 = vld [vmem:[#allocation8 + $0x180] sm:$0xff]
    %v280 = vld [vmem:[#allocation8 + $0x188] sm:$0xf]
    %v281 = vld [vmem:[#allocation8 + $0x18c] sm:$0xff]
    %v282 = vld [vmem:[#allocation8 + $0x194] sm:$0xf]
    %v283 = vld [vmem:[#allocation8 + $0x198] sm:$0xff]
    %v284 = vld [vmem:[#allocation8 + $0x1a0] sm:$0xf]
    %v285 = vld [vmem:[#allocation8 + $0x1a4] sm:$0xff]
    %v286 = vld [vmem:[#allocation8 + $0x1ac] sm:$0xf]
    %v287 = vld [vmem:[#allocation8 + $0x1b0] sm:$0xff]
    %v288 = vld [vmem:[#allocation8 + $0x1b8] sm:$0xf]
    %v289 = vld [vmem:[#allocation8 + $0x1bc] sm:$0xff]
    %v290 = vld [vmem:[#allocation8 + $0x1c4] sm:$0xf]
    %v291 = vld [vmem:[#allocation8 + $0x1c8] sm:$0xff]
    %v292 = vld [vmem:[#allocation8 + $0x1d0] sm:$0xf]
    %v293 = vld [vmem:[#allocation8 + $0x1d4] sm:$0xff]
    %v294 = vld [vmem:[#allocation8 + $0x1dc] sm:$0xf]
    %v295 = vld [vmem:[#allocation8 + $0x1e0] sm:$0xff]
    %v296 = vld [vmem:[#allocation8 + $0x1e8] sm:$0xf]
    %v297 = vld [vmem:[#allocation8 + $0x1ec] sm:$0xff]
    %v298 = vld [vmem:[#allocation8 + $0x1f4] sm:$0xf]
    %v299 = vld [vmem:[#allocation8 + $0x1f8] sm:$0xff]
    %v300 = vld [vmem:[#allocation8 + $0x200] sm:$0xf]
    %v301 = vld [vmem:[#allocation8 + $0x204] sm:$0xff]
    %v302 = vld [vmem:[#allocation8 + $0x20c] sm:$0xf]
    %v303 = vld [vmem:[#allocation8 + $0x210] sm:$0xff]
    %v304 = vld [vmem:[#allocation8 + $0x218] sm:$0xf]
    %v305 = vld [vmem:[#allocation8 + $0x21c] sm:$0xff]
    %v306 = vld [vmem:[#allocation8 + $0x224] sm:$0xf]
    %v307 = vld [vmem:[#allocation8 + $0x228] sm:$0xff]
    %v308 = vld [vmem:[#allocation8 + $0x230] sm:$0xf]
    %v309 = vld [vmem:[#allocation8 + $0x234] sm:$0xff]
    %v310 = vld [vmem:[#allocation8 + $0x23c] sm:$0xf]
    %v312 = vperm.slane %v214, 0
    %v313 = vperm.slane %v214, 1
    %v314 = vperm.slane %v214, 2
    %v414 = vunpack.c.l.b16 %v215
    %v415 = vunpack.c.h.b16 %v215
    %v416 = vunpack.c.l.b16 %v216
    %v417 = vunpack.c.l.b16 %v217
    %v418 = vunpack.c.h.b16 %v217
    %v419 = vunpack.c.l.b16 %v218
    %v420 = vunpack.c.l.b16 %v219
    %v421 = vunpack.c.h.b16 %v219
    %v422 = vunpack.c.l.b16 %v220
    %v423 = vunpack.c.l.b16 %v221
    %v424 = vunpack.c.h.b16 %v221
    %v425 = vunpack.c.l.b16 %v222
    %v426 = vunpack.c.l.b16 %v223
    %v427 = vunpack.c.h.b16 %v223
    %v428 = vunpack.c.l.b16 %v224
    %v429 = vunpack.c.l.b16 %v225
    %v430 = vunpack.c.h.b16 %v225
    %v431 = vunpack.c.l.b16 %v226
    %v432 = vunpack.c.l.b16 %v227
    %v433 = vunpack.c.h.b16 %v227
    %v434 = vunpack.c.l.b16 %v228
    %v435 = vunpack.c.l.b16 %v229
    %v436 = vunpack.c.h.b16 %v229
    %v437 = vunpack.c.l.b16 %v230
    %v438 = vunpack.c.l.b16 %v231
    %v439 = vunpack.c.h.b16 %v231
    %v440 = vunpack.c.l.b16 %v232
    %v441 = vunpack.c.l.b16 %v233
    %v442 = vunpack.c.h.b16 %v233
    %v443 = vunpack.c.l.b16 %v234
    %v444 = vunpack.c.l.b16 %v235
    %v445 = vunpack.c.h.b16 %v235
    %v446 = vunpack.c.l.b16 %v236
    %v447 = vunpack.c.l.b16 %v237
    %v448 = vunpack.c.h.b16 %v237
    %v449 = vunpack.c.l.b16 %v238
    %v450 = vunpack.c.l.b16 %v239
    %v451 = vunpack.c.h.b16 %v239
    %v452 = vunpack.c.l.b16 %v240
    %v453 = vunpack.c.l.b16 %v241
    %v454 = vunpack.c.h.b16 %v241
    %v455 = vunpack.c.l.b16 %v242
    %v456 = vunpack.c.l.b16 %v243
    %v457 = vunpack.c.h.b16 %v243
    %v458 = vunpack.c.l.b16 %v244
    %v459 = vunpack.c.l.b16 %v245
    %v460 = vunpack.c.h.b16 %v245
    %v461 = vunpack.c.l.b16 %v246
    %v462 = vunpack.c.l.b16 %v247
    %v463 = vunpack.c.h.b16 %v247
    %v464 = vunpack.c.l.b16 %v248
    %v465 = vunpack.c.l.b16 %v249
    %v466 = vunpack.c.h.b16 %v249
    %v467 = vunpack.c.l.b16 %v250
    %v468 = vunpack.c.l.b16 %v251
    %v469 = vunpack.c.h.b16 %v251
    %v470 = vunpack.c.l.b16 %v252
    %v471 = vunpack.c.l.b16 %v253
    %v472 = vunpack.c.h.b16 %v253
    %v473 = vunpack.c.l.b16 %v254
    %v474 = vunpack.c.l.b16 %v255
    %v475 = vunpack.c.h.b16 %v255
    %v476 = vunpack.c.l.b16 %v256
    %v477 = vunpack.c.l.b16 %v257
    %v478 = vunpack.c.h.b16 %v257
    %v479 = vunpack.c.l.b16 %v258
    %v480 = vunpack.c.l.b16 %v259
    %v481 = vunpack.c.h.b16 %v259
    %v482 = vunpack.c.l.b16 %v260
    %v483 = vunpack.c.l.b16 %v261
    %v484 = vunpack.c.h.b16 %v261
    %v485 = vunpack.c.l.b16 %v262
    %v486 = vunpack.c.l.b16 %v263
    %v487 = vunpack.c.h.b16 %v263
    %v488 = vunpack.c.l.b16 %v264
    %v489 = vunpack.c.l.b16 %v265
    %v490 = vunpack.c.h.b16 %v265
    %v491 = vunpack.c.l.b16 %v266
    %v492 = vunpack.c.l.b16 %v267
    %v493 = vunpack.c.h.b16 %v267
    %v494 = vunpack.c.l.b16 %v268
    %v495 = vunpack.c.l.b16 %v269
    %v496 = vunpack.c.h.b16 %v269
    %v497 = vunpack.c.l.b16 %v270
    %v498 = vunpack.c.l.b16 %v271
    %v499 = vunpack.c.h.b16 %v271
    %v500 = vunpack.c.l.b16 %v272
    %v501 = vunpack.c.l.b16 %v273
    %v502 = vunpack.c.h.b16 %v273
    %v503 = vunpack.c.l.b16 %v274
    %v504 = vunpack.c.l.b16 %v275
    %v505 = vunpack.c.h.b16 %v275
    %v506 = vunpack.c.l.b16 %v276
    %v507 = vunpack.c.l.b16 %v277
    %v508 = vunpack.c.h.b16 %v277
    %v509 = vunpack.c.l.b16 %v278
    %v510 = vunpack.c.l.b16 %v279
    %v511 = vunpack.c.h.b16 %v279
    %v512 = vunpack.c.l.b16 %v280
    %v513 = vunpack.c.l.b16 %v281
    %v514 = vunpack.c.h.b16 %v281
    %v515 = vunpack.c.l.b16 %v282
    %v516 = vunpack.c.l.b16 %v283
    %v517 = vunpack.c.h.b16 %v283
    %v518 = vunpack.c.l.b16 %v284
    %v519 = vunpack.c.l.b16 %v285
    %v520 = vunpack.c.h.b16 %v285
    %v521 = vunpack.c.l.b16 %v286
    %v522 = vunpack.c.l.b16 %v287
    %v523 = vunpack.c.h.b16 %v287
    %v524 = vunpack.c.l.b16 %v288
    %v525 = vunpack.c.l.b16 %v289
    %v526 = vunpack.c.h.b16 %v289
    %v527 = vunpack.c.l.b16 %v290
    %v528 = vunpack.c.l.b16 %v291
    %v529 = vunpack.c.h.b16 %v291
    %v530 = vunpack.c.l.b16 %v292
    %v531 = vunpack.c.l.b16 %v293
    %v532 = vunpack.c.h.b16 %v293
    %v533 = vunpack.c.l.b16 %v294
    %v534 = vunpack.c.l.b16 %v295
    %v535 = vunpack.c.h.b16 %v295
    %v536 = vunpack.c.l.b16 %v296
    %v537 = vunpack.c.l.b16 %v297
    %v538 = vunpack.c.h.b16 %v297
    %v539 = vunpack.c.l.b16 %v298
    %v540 = vunpack.c.l.b16 %v299
    %v541 = vunpack.c.h.b16 %v299
    %v542 = vunpack.c.l.b16 %v300
    %v543 = vunpack.c.l.b16 %v301
    %v544 = vunpack.c.h.b16 %v301
    %v545 = vunpack.c.l.b16 %v302
    %v546 = vunpack.c.l.b16 %v303
    %v547 = vunpack.c.h.b16 %v303
    %v548 = vunpack.c.l.b16 %v304
    %v549 = vunpack.c.l.b16 %v305
    %v550 = vunpack.c.h.b16 %v305
    %v551 = vunpack.c.l.b16 %v306
    %v552 = vunpack.c.l.b16 %v307
    %v553 = vunpack.c.h.b16 %v307
    %v554 = vunpack.c.l.b16 %v308
    %v555 = vunpack.c.l.b16 %v309
    %v556 = vunpack.c.h.b16 %v309
    %v557 = vunpack.c.l.b16 %v310
    %v558 = vpack.c.b16 %v417, %v414
    %v559 = vpack.c.b16 %v418, %v415
    %v560 = vpack.c.b16 %v419, %v416
    %v561 = vpack.c.b16 %v423, %v420
    %v562 = vpack.c.b16 %v424, %v421
    %v563 = vpack.c.b16 %v425, %v422
    %v564 = vpack.c.b16 %v429, %v426
    %v565 = vpack.c.b16 %v430, %v427
    %v566 = vpack.c.b16 %v431, %v428
    %v567 = vpack.c.b16 %v435, %v432
    %v568 = vpack.c.b16 %v436, %v433
    %v569 = vpack.c.b16 %v437, %v434
    %v570 = vpack.c.b16 %v441, %v438
    %v571 = vpack.c.b16 %v442, %v439
    %v572 = vpack.c.b16 %v443, %v440
    %v573 = vpack.c.b16 %v447, %v444
    %v574 = vpack.c.b16 %v448, %v445
    %v575 = vpack.c.b16 %v449, %v446
    %v576 = vpack.c.b16 %v453, %v450
    %v577 = vpack.c.b16 %v454, %v451
    %v578 = vpack.c.b16 %v455, %v452
    %v579 = vpack.c.b16 %v459, %v456
    %v580 = vpack.c.b16 %v460, %v457
    %v581 = vpack.c.b16 %v461, %v458
    %v582 = vpack.c.b16 %v465, %v462
    %v583 = vpack.c.b16 %v466, %v463
    %v584 = vpack.c.b16 %v467, %v464
    %v585 = vpack.c.b16 %v471, %v468
    %v586 = vpack.c.b16 %v472, %v469
    %v587 = vpack.c.b16 %v473, %v470
    %v588 = vpack.c.b16 %v477, %v474
    %v589 = vpack.c.b16 %v478, %v475
    %v590 = vpack.c.b16 %v479, %v476
    %v591 = vpack.c.b16 %v483, %v480
    %v592 = vpack.c.b16 %v484, %v481
    %v593 = vpack.c.b16 %v485, %v482
    %v594 = vpack.c.b16 %v489, %v486
    %v595 = vpack.c.b16 %v490, %v487
    %v596 = vpack.c.b16 %v491, %v488
    %v597 = vpack.c.b16 %v495, %v492
    %v598 = vpack.c.b16 %v496, %v493
    %v599 = vpack.c.b16 %v497, %v494
    %v600 = vpack.c.b16 %v501, %v498
    %v601 = vpack.c.b16 %v502, %v499
    %v602 = vpack.c.b16 %v503, %v500
    %v603 = vpack.c.b16 %v507, %v504
    %v604 = vpack.c.b16 %v508, %v505
    %v605 = vpack.c.b16 %v509, %v506
    %v606 = vpack.c.b16 %v513, %v510
    %v607 = vpack.c.b16 %v514, %v511
    %v608 = vpack.c.b16 %v515, %v512
    %v609 = vpack.c.b16 %v519, %v516
    %v610 = vpack.c.b16 %v520, %v517
    %v611 = vpack.c.b16 %v521, %v518
    %v612 = vpack.c.b16 %v525, %v522
    %v613 = vpack.c.b16 %v526, %v523
    %v614 = vpack.c.b16 %v527, %v524
    %v615 = vpack.c.b16 %v531, %v528
    %v616 = vpack.c.b16 %v532, %v529
    %v617 = vpack.c.b16 %v533, %v530
    %v618 = vpack.c.b16 %v537, %v534
    %v619 = vpack.c.b16 %v538, %v535
    %v620 = vpack.c.b16 %v539, %v536
    %v621 = vpack.c.b16 %v543, %v540
    %v622 = vpack.c.b16 %v544, %v541
    %v623 = vpack.c.b16 %v545, %v542
    %v624 = vpack.c.b16 %v549, %v546
    %v625 = vpack.c.b16 %v550, %v547
    %v626 = vpack.c.b16 %v551, %v548
    %v627 = vpack.c.b16 %v555, %v552
    %v628 = vpack.c.b16 %v556, %v553
    %v629 = vpack.c.b16 %v557, %v554
    %702 = vmatpush.bf16.msra.mxu0 %v579
    %703 = vmatpush.bf16.msra.mxu0 %v576
    %704 = vmatpush.bf16.msra.mxu0 %v573
    %705 = vmatpush.bf16.msra.mxu0 %v570
    %706 = vmatpush.bf16.msra.mxu0 %v567
    %707 = vmatpush.bf16.msra.mxu0 %v564
    %708 = vmatpush.bf16.msra.mxu0 %v561
    %709 = vmatpush.bf16.msra.mxu0 %v558
    %710 = vmatmul.bf16.gmra.mxu0 %v211
    %v711 = vpop.f32.mrf.mxu0
    %v712 = vadd.f32 %v312, %v711
    %v713 = vpop.f32.mrf.mxu0
    %v714 = vadd.f32 %v312, %v713
    %715 = vdwg.mxu0
    %716 = vmatpush.bf16.msra.mxu0 %v603
    %717 = vmatpush.bf16.msra.mxu0 %v600
    %718 = vmatpush.bf16.msra.mxu0 %v597
    %719 = vmatpush.bf16.msra.mxu0 %v594
    %720 = vmatpush.bf16.msra.mxu0 %v591
    %721 = vmatpush.bf16.msra.mxu0 %v588
    %722 = vmatpush.bf16.msra.mxu0 %v585
    %723 = vmatpush.bf16.msra.mxu0 %v582
    %724 = vmatmul.bf16.gmra.mxu0 %v212
    %v725 = vpop.f32.mrf.mxu0
    %v726 = vadd.f32 %v712, %v725
    %v727 = vpop.f32.mrf.mxu0
    %v728 = vadd.f32 %v714, %v727
    %729 = vdwg.mxu0
    %730 = vmatpush.bf16.msra.mxu0 %v627
    %731 = vmatpush.bf16.msra.mxu0 %v624
    %732 = vmatpush.bf16.msra.mxu0 %v621
    %733 = vmatpush.bf16.msra.mxu0 %v618
    %734 = vmatpush.bf16.msra.mxu0 %v615
    %735 = vmatpush.bf16.msra.mxu0 %v612
    %736 = vmatpush.bf16.msra.mxu0 %v609
    %737 = vmatpush.bf16.msra.mxu0 %v606
    %738 = vmatmul.bf16.gmra.mxu0 %v213
    %v739 = vpop.f32.mrf.mxu0
    %v740 = vadd.f32 %v726, %v739
    %v741 = vpop.f32.mrf.mxu0
    %v742 = vadd.f32 %v728, %v741
    %743 = vdwg.mxu0
    %744 = vmatpush.bf16.msra.mxu0 %v580
    %745 = vmatpush.bf16.msra.mxu0 %v577
    %746 = vmatpush.bf16.msra.mxu0 %v574
    %747 = vmatpush.bf16.msra.mxu0 %v571
    %748 = vmatpush.bf16.msra.mxu0 %v568
    %749 = vmatpush.bf16.msra.mxu0 %v565
    %750 = vmatpush.bf16.msra.mxu0 %v562
    %751 = vmatpush.bf16.msra.mxu0 %v559
    %752 = vmatmul.bf16.gmra.mxu0 %v211
    %v753 = vpop.f32.mrf.mxu0
    %v754 = vadd.f32 %v313, %v753
    %v755 = vpop.f32.mrf.mxu0
    %v756 = vadd.f32 %v313, %v755
    %757 = vdwg.mxu0
    %758 = vmatpush.bf16.msra.mxu0 %v604
    %759 = vmatpush.bf16.msra.mxu0 %v601
    %760 = vmatpush.bf16.msra.mxu0 %v598
    %761 = vmatpush.bf16.msra.mxu0 %v595
    %762 = vmatpush.bf16.msra.mxu0 %v592
    %763 = vmatpush.bf16.msra.mxu0 %v589
    %764 = vmatpush.bf16.msra.mxu0 %v586
    %765 = vmatpush.bf16.msra.mxu0 %v583
    %766 = vmatmul.bf16.gmra.mxu0 %v212
    %v767 = vpop.f32.mrf.mxu0
    %v768 = vadd.f32 %v754, %v767
    %v769 = vpop.f32.mrf.mxu0
    %v770 = vadd.f32 %v756, %v769
    %771 = vdwg.mxu0
    %772 = vmatpush.bf16.msra.mxu0 %v628
    %773 = vmatpush.bf16.msra.mxu0 %v625
    %774 = vmatpush.bf16.msra.mxu0 %v622
    %775 = vmatpush.bf16.msra.mxu0 %v619
    %776 = vmatpush.bf16.msra.mxu0 %v616
    %777 = vmatpush.bf16.msra.mxu0 %v613
    %778 = vmatpush.bf16.msra.mxu0 %v610
    %779 = vmatpush.bf16.msra.mxu0 %v607
    %780 = vmatmul.bf16.gmra.mxu0 %v213
    %v781 = vpop.f32.mrf.mxu0
    %v782 = vadd.f32 %v768, %v781
    %v783 = vpop.f32.mrf.mxu0
    %v784 = vadd.f32 %v770, %v783
    %785 = vdwg.mxu0
    %786 = vmatpush.bf16.msra.mxu0 %v581
    %787 = vmatpush.bf16.msra.mxu0 %v578
    %788 = vmatpush.bf16.msra.mxu0 %v575
    %789 = vmatpush.bf16.msra.mxu0 %v572
    %790 = vmatpush.bf16.msra.mxu0 %v569
    %791 = vmatpush.bf16.msra.mxu0 %v566
    %792 = vmatpush.bf16.msra.mxu0 %v563
    %793 = vmatpush.bf16.msra.mxu0 %v560
    %794 = vmatmul.bf16.gmra.mxu0 %v211
    %v795 = vpop.f32.mrf.mxu0
    %v796 = vadd.f32 %v314, %v795
    %v797 = vpop.f32.mrf.mxu0
    %v798 = vadd.f32 %v314, %v797
    %799 = vdwg.mxu0
    %800 = vmatpush.bf16.msra.mxu0 %v605
    %801 = vmatpush.bf16.msra.mxu0 %v602
    %802 = vmatpush.bf16.msra.mxu0 %v599
    %803 = vmatpush.bf16.msra.mxu0 %v596
    %804 = vmatpush.bf16.msra.mxu0 %v593
    %805 = vmatpush.bf16.msra.mxu0 %v590
    %806 = vmatpush.bf16.msra.mxu0 %v587
    %807 = vmatpush.bf16.msra.mxu0 %v584
    %808 = vmatmul.bf16.gmra.mxu0 %v212
    %v809 = vpop.f32.mrf.mxu0
    %v810 = vadd.f32 %v796, %v809
    %v811 = vpop.f32.mrf.mxu0
    %v812 = vadd.f32 %v798, %v811
    %813 = vdwg.mxu0
    %814 = vmatpush.bf16.msra.mxu0 %v629
    %815 = vmatpush.bf16.msra.mxu0 %v626
    %816 = vmatpush.bf16.msra.mxu0 %v623
    %817 = vmatpush.bf16.msra.mxu0 %v620
    %818 = vmatpush.bf16.msra.mxu0 %v617
    %819 = vmatpush.bf16.msra.mxu0 %v614
    %820 = vmatpush.bf16.msra.mxu0 %v611
    %821 = vmatpush.bf16.msra.mxu0 %v608
    %822 = vmatmul.bf16.gmra.mxu0 %v213
    %v823 = vpop.f32.mrf.mxu0
    %v824 = vadd.f32 %v810, %v823
    %v825 = vpop.f32.mrf.mxu0
    %v826 = vadd.f32 %v812, %v825
    %827 = vdwg.mxu0
    %v828 = vmax.f32 %v740, 0.0
    %v829 = vmax.f32 %v782, 0.0
    %v830 = vmax.f32 %v824, 0.0
    %v831 = vmax.f32 %v742, 0.0
    %v832 = vmax.f32 %v784, 0.0
    %v833 = vmax.f32 %v826, 0.0
    %v834 = vpack.c.bf16 %v831, %v828
    %v835 = vpack.c.bf16 %v832, %v829
    %v836 = vpack.c.bf16 %v833, %v830
    %v837 = vld [vmem:[%s6] sm:$0x3]
    %v838 = vld [vmem:[#allocation10] sm:$0xff]
    %v839 = vld [vmem:[#allocation10 + $0x8] sm:$0xff]
    %v840 = vld [vmem:[#allocation10 + $0x10] sm:$0xff]
    %v841 = vld [vmem:[#allocation10 + $0x18] sm:$0xff]
    %v842 = vld [vmem:[#allocation10 + $0x20] sm:$0xff]
    %v843 = vld [vmem:[#allocation10 + $0x28] sm:$0xff]
    %v844 = vld [vmem:[#allocation10 + $0x30] sm:$0xff]
    %v845 = vld [vmem:[#allocation10 + $0x38] sm:$0xff]
    %v846 = vld [vmem:[#allocation10 + $0x40] sm:$0xff]
    %v847 = vld [vmem:[#allocation10 + $0x48] sm:$0xff]
    %v848 = vld [vmem:[#allocation10 + $0x50] sm:$0xff]
    %v849 = vld [vmem:[#allocation10 + $0x58] sm:$0xff]
    %v850 = vld [vmem:[#allocation10 + $0x60] sm:$0xff]
    %v851 = vld [vmem:[#allocation10 + $0x68] sm:$0xff]
    %v852 = vld [vmem:[#allocation10 + $0x70] sm:$0xff]
    %v853 = vld [vmem:[#allocation10 + $0x78] sm:$0xff]
    %v854 = vld [vmem:[#allocation10 + $0x80] sm:$0xff]
    %v855 = vld [vmem:[#allocation10 + $0x88] sm:$0xff]
    %v856 = vld [vmem:[#allocation10 + $0x90] sm:$0xff]
    %v857 = vld [vmem:[#allocation10 + $0x98] sm:$0xff]
    %v858 = vld [vmem:[#allocation10 + $0xa0] sm:$0xff]
    %v859 = vld [vmem:[#allocation10 + $0xa8] sm:$0xff]
    %v860 = vld [vmem:[#allocation10 + $0xb0] sm:$0xff]
    %v861 = vld [vmem:[#allocation10 + $0xb8] sm:$0xff]
    %v862 = vld [vmem:[#allocation10 + $0xc0] sm:$0xff]
    %v863 = vld [vmem:[#allocation10 + $0xc8] sm:$0xff]
    %v864 = vld [vmem:[#allocation10 + $0xd0] sm:$0xff]
    %v865 = vld [vmem:[#allocation10 + $0xd8] sm:$0xff]
    %v866 = vld [vmem:[#allocation10 + $0xe0] sm:$0xff]
    %v867 = vld [vmem:[#allocation10 + $0xe8] sm:$0xff]
    %v868 = vld [vmem:[#allocation10 + $0xf0] sm:$0xff]
    %v869 = vld [vmem:[#allocation10 + $0xf8] sm:$0xff]
    %v870 = vld [vmem:[#allocation10 + $0x100] sm:$0xff]
    %v871 = vld [vmem:[#allocation10 + $0x108] sm:$0xff]
    %v872 = vld [vmem:[#allocation10 + $0x110] sm:$0xff]
    %v873 = vld [vmem:[#allocation10 + $0x118] sm:$0xff]
    %v874 = vld [vmem:[#allocation10 + $0x120] sm:$0xff]
    %v875 = vld [vmem:[#allocation10 + $0x128] sm:$0xff]
    %v876 = vld [vmem:[#allocation10 + $0x130] sm:$0xff]
    %v877 = vld [vmem:[#allocation10 + $0x138] sm:$0xff]
    %v878 = vld [vmem:[#allocation10 + $0x140] sm:$0xff]
    %v879 = vld [vmem:[#allocation10 + $0x148] sm:$0xff]
    %v880 = vld [vmem:[#allocation10 + $0x150] sm:$0xff]
    %v881 = vld [vmem:[#allocation10 + $0x158] sm:$0xff]
    %v882 = vld [vmem:[#allocation10 + $0x160] sm:$0xff]
    %v883 = vld [vmem:[#allocation10 + $0x168] sm:$0xff]
    %v884 = vld [vmem:[#allocation10 + $0x170] sm:$0xff]
    %v885 = vld [vmem:[#allocation10 + $0x178] sm:$0xff]
    %v887 = vperm.slane %v837, 0
    %v888 = vperm.slane %v837, 1
    %v939 = vunpack.c.l.b16 %v838
    %v940 = vunpack.c.h.b16 %v838
    %v941 = vunpack.c.l.b16 %v839
    %v942 = vunpack.c.h.b16 %v839
    %v943 = vunpack.c.l.b16 %v840
    %v944 = vunpack.c.h.b16 %v840
    %v945 = vunpack.c.l.b16 %v841
    %v946 = vunpack.c.h.b16 %v841
    %v947 = vunpack.c.l.b16 %v842
    %v948 = vunpack.c.h.b16 %v842
    %v949 = vunpack.c.l.b16 %v843
    %v950 = vunpack.c.h.b16 %v843
    %v951 = vunpack.c.l.b16 %v844
    %v952 = vunpack.c.h.b16 %v844
    %v953 = vunpack.c.l.b16 %v845
    %v954 = vunpack.c.h.b16 %v845
    %v955 = vunpack.c.l.b16 %v846
    %v956 = vunpack.c.h.b16 %v846
    %v957 = vunpack.c.l.b16 %v847
    %v958 = vunpack.c.h.b16 %v847
    %v959 = vunpack.c.l.b16 %v848
    %v960 = vunpack.c.h.b16 %v848
    %v961 = vunpack.c.l.b16 %v849
    %v962 = vunpack.c.h.b16 %v849
    %v963 = vunpack.c.l.b16 %v850
    %v964 = vunpack.c.h.b16 %v850
    %v965 = vunpack.c.l.b16 %v851
    %v966 = vunpack.c.h.b16 %v851
    %v967 = vunpack.c.l.b16 %v852
    %v968 = vunpack.c.h.b16 %v852
    %v969 = vunpack.c.l.b16 %v853
    %v970 = vunpack.c.h.b16 %v853
    %v971 = vunpack.c.l.b16 %v854
    %v972 = vunpack.c.h.b16 %v854
    %v973 = vunpack.c.l.b16 %v855
    %v974 = vunpack.c.h.b16 %v855
    %v975 = vunpack.c.l.b16 %v856
    %v976 = vunpack.c.h.b16 %v856
    %v977 = vunpack.c.l.b16 %v857
    %v978 = vunpack.c.h.b16 %v857
    %v979 = vunpack.c.l.b16 %v858
    %v980 = vunpack.c.h.b16 %v858
    %v981 = vunpack.c.l.b16 %v859
    %v982 = vunpack.c.h.b16 %v859
    %v983 = vunpack.c.l.b16 %v860
    %v984 = vunpack.c.h.b16 %v860
    %v985 = vunpack.c.l.b16 %v861
    %v986 = vunpack.c.h.b16 %v861
    %v987 = vunpack.c.l.b16 %v862
    %v988 = vunpack.c.h.b16 %v862
    %v989 = vunpack.c.l.b16 %v863
    %v990 = vunpack.c.h.b16 %v863
    %v991 = vunpack.c.l.b16 %v864
    %v992 = vunpack.c.h.b16 %v864
    %v993 = vunpack.c.l.b16 %v865
    %v994 = vunpack.c.h.b16 %v865
    %v995 = vunpack.c.l.b16 %v866
    %v996 = vunpack.c.h.b16 %v866
    %v997 = vunpack.c.l.b16 %v867
    %v998 = vunpack.c.h.b16 %v867
    %v999 = vunpack.c.l.b16 %v868
    %v1000 = vunpack.c.h.b16 %v868
    %v1001 = vunpack.c.l.b16 %v869
    %v1002 = vunpack.c.h.b16 %v869
    %v1003 = vunpack.c.l.b16 %v870
    %v1004 = vunpack.c.h.b16 %v870
    %v1005 = vunpack.c.l.b16 %v871
    %v1006 = vunpack.c.h.b16 %v871
    %v1007 = vunpack.c.l.b16 %v872
    %v1008 = vunpack.c.h.b16 %v872
    %v1009 = vunpack.c.l.b16 %v873
    %v1010 = vunpack.c.h.b16 %v873
    %v1011 = vunpack.c.l.b16 %v874
    %v1012 = vunpack.c.h.b16 %v874
    %v1013 = vunpack.c.l.b16 %v875
    %v1014 = vunpack.c.h.b16 %v875
    %v1015 = vunpack.c.l.b16 %v876
    %v1016 = vunpack.c.h.b16 %v876
    %v1017 = vunpack.c.l.b16 %v877
    %v1018 = vunpack.c.h.b16 %v877
    %v1019 = vunpack.c.l.b16 %v878
    %v1020 = vunpack.c.h.b16 %v878
    %v1021 = vunpack.c.l.b16 %v879
    %v1022 = vunpack.c.h.b16 %v879
    %v1023 = vunpack.c.l.b16 %v880
    %v1024 = vunpack.c.h.b16 %v880
    %v1025 = vunpack.c.l.b16 %v881
    %v1026 = vunpack.c.h.b16 %v881
    %v1027 = vunpack.c.l.b16 %v882
    %v1028 = vunpack.c.h.b16 %v882
    %v1029 = vunpack.c.l.b16 %v883
    %v1030 = vunpack.c.h.b16 %v883
    %v1031 = vunpack.c.l.b16 %v884
    %v1032 = vunpack.c.h.b16 %v884
    %v1033 = vunpack.c.l.b16 %v885
    %v1034 = vunpack.c.h.b16 %v885
    %v1035 = vpack.c.b16 %v941, %v939
    %v1036 = vpack.c.b16 %v942, %v940
    %v1037 = vpack.c.b16 %v945, %v943
    %v1038 = vpack.c.b16 %v946, %v944
    %v1039 = vpack.c.b16 %v949, %v947
    %v1040 = vpack.c.b16 %v950, %v948
    %v1041 = vpack.c.b16 %v953, %v951
    %v1042 = vpack.c.b16 %v954, %v952
    %v1043 = vpack.c.b16 %v957, %v955
    %v1044 = vpack.c.b16 %v958, %v956
    %v1045 = vpack.c.b16 %v961, %v959
    %v1046 = vpack.c.b16 %v962, %v960
    %v1047 = vpack.c.b16 %v965, %v963
    %v1048 = vpack.c.b16 %v966, %v964
    %v1049 = vpack.c.b16 %v969, %v967
    %v1050 = vpack.c.b16 %v970, %v968
    %v1051 = vpack.c.b16 %v973, %v971
    %v1052 = vpack.c.b16 %v974, %v972
    %v1053 = vpack.c.b16 %v977, %v975
    %v1054 = vpack.c.b16 %v978, %v976
    %v1055 = vpack.c.b16 %v981, %v979
    %v1056 = vpack.c.b16 %v982, %v980
    %v1057 = vpack.c.b16 %v985, %v983
    %v1058 = vpack.c.b16 %v986, %v984
    %v1059 = vpack.c.b16 %v989, %v987
    %v1060 = vpack.c.b16 %v990, %v988
    %v1061 = vpack.c.b16 %v993, %v991
    %v1062 = vpack.c.b16 %v994, %v992
    %v1063 = vpack.c.b16 %v997, %v995
    %v1064 = vpack.c.b16 %v998, %v996
    %v1065 = vpack.c.b16 %v1001, %v999
    %v1066 = vpack.c.b16 %v1002, %v1000
    %v1067 = vpack.c.b16 %v1005, %v1003
    %v1068 = vpack.c.b16 %v1006, %v1004
    %v1069 = vpack.c.b16 %v1009, %v1007
    %v1070 = vpack.c.b16 %v1010, %v1008
    %v1071 = vpack.c.b16 %v1013, %v1011
    %v1072 = vpack.c.b16 %v1014, %v1012
    %v1073 = vpack.c.b16 %v1017, %v1015
    %v1074 = vpack.c.b16 %v1018, %v1016
    %v1075 = vpack.c.b16 %v1021, %v1019
    %v1076 = vpack.c.b16 %v1022, %v1020
    %v1077 = vpack.c.b16 %v1025, %v1023
    %v1078 = vpack.c.b16 %v1026, %v1024
    %v1079 = vpack.c.b16 %v1029, %v1027
    %v1080 = vpack.c.b16 %v1030, %v1028
    %v1081 = vpack.c.b16 %v1033, %v1031
    %v1082 = vpack.c.b16 %v1034, %v1032
    %1131 = vmatpush.bf16.msra.mxu0 %v1049
    %1132 = vmatpush.bf16.msra.mxu0 %v1047
    %1133 = vmatpush.bf16.msra.mxu0 %v1045
    %1134 = vmatpush.bf16.msra.mxu0 %v1043
    %1135 = vmatpush.bf16.msra.mxu0 %v1041
    %1136 = vmatpush.bf16.msra.mxu0 %v1039
    %1137 = vmatpush.bf16.msra.mxu0 %v1037
    %1138 = vmatpush.bf16.msra.mxu0 %v1035
    %1139 = vmatmul.bf16.gmra.mxu0 %v834
    %v1140 = vpop.f32.mrf.mxu0
    %v1141 = vadd.f32 %v887, %v1140
    %v1142 = vpop.f32.mrf.mxu0
    %v1143 = vadd.f32 %v887, %v1142
    %1144 = vdwg.mxu0
    %1145 = vmatpush.bf16.msra.mxu0 %v1065
    %1146 = vmatpush.bf16.msra.mxu0 %v1063
    %1147 = vmatpush.bf16.msra.mxu0 %v1061
    %1148 = vmatpush.bf16.msra.mxu0 %v1059
    %1149 = vmatpush.bf16.msra.mxu0 %v1057
    %1150 = vmatpush.bf16.msra.mxu0 %v1055
    %1151 = vmatpush.bf16.msra.mxu0 %v1053
    %1152 = vmatpush.bf16.msra.mxu0 %v1051
    %1153 = vmatmul.bf16.gmra.mxu0 %v835
    %v1154 = vpop.f32.mrf.mxu0
    %v1155 = vadd.f32 %v1141, %v1154
    %v1156 = vpop.f32.mrf.mxu0
    %v1157 = vadd.f32 %v1143, %v1156
    %1158 = vdwg.mxu0
    %1159 = vmatpush.bf16.msra.mxu0 %v1081
    %1160 = vmatpush.bf16.msra.mxu0 %v1079
    %1161 = vmatpush.bf16.msra.mxu0 %v1077
    %1162 = vmatpush.bf16.msra.mxu0 %v1075
    %1163 = vmatpush.bf16.msra.mxu0 %v1073
    %1164 = vmatpush.bf16.msra.mxu0 %v1071
    %1165 = vmatpush.bf16.msra.mxu0 %v1069
    %1166 = vmatpush.bf16.msra.mxu0 %v1067
    %1167 = vmatmul.bf16.gmra.mxu0 %v836
    %v1168 = vpop.f32.mrf.mxu0
    %v1169 = vadd.f32 %v1155, %v1168
    %v1170 = vpop.f32.mrf.mxu0
    %v1171 = vadd.f32 %v1157, %v1170
    %1172 = vdwg.mxu0
    %1173 = vmatpush.bf16.msra.mxu0 %v1050
    %1174 = vmatpush.bf16.msra.mxu0 %v1048
    %1175 = vmatpush.bf16.msra.mxu0 %v1046
    %1176 = vmatpush.bf16.msra.mxu0 %v1044
    %1177 = vmatpush.bf16.msra.mxu0 %v1042
    %1178 = vmatpush.bf16.msra.mxu0 %v1040
    %1179 = vmatpush.bf16.msra.mxu0 %v1038
    %1180 = vmatpush.bf16.msra.mxu0 %v1036
    %1181 = vmatmul.bf16.gmra.mxu0 %v834
    %v1182 = vpop.f32.mrf.mxu0
    %v1183 = vadd.f32 %v888, %v1182
    %v1184 = vpop.f32.mrf.mxu0
    %v1185 = vadd.f32 %v888, %v1184
    %1186 = vdwg.mxu0
    %1187 = vmatpush.bf16.msra.mxu0 %v1066
    %1188 = vmatpush.bf16.msra.mxu0 %v1064
    %1189 = vmatpush.bf16.msra.mxu0 %v1062
    %1190 = vmatpush.bf16.msra.mxu0 %v1060
    %1191 = vmatpush.bf16.msra.mxu0 %v1058
    %1192 = vmatpush.bf16.msra.mxu0 %v1056
    %1193 = vmatpush.bf16.msra.mxu0 %v1054
    %1194 = vmatpush.bf16.msra.mxu0 %v1052
    %1195 = vmatmul.bf16.gmra.mxu0 %v835
    %v1196 = vpop.f32.mrf.mxu0
    %v1197 = vadd.f32 %v1183, %v1196
    %v1198 = vpop.f32.mrf.mxu0
    %v1199 = vadd.f32 %v1185, %v1198
    %1200 = vdwg.mxu0
    %1201 = vmatpush.bf16.msra.mxu0 %v1082
    %1202 = vmatpush.bf16.msra.mxu0 %v1080
    %1203 = vmatpush.bf16.msra.mxu0 %v1078
    %1204 = vmatpush.bf16.msra.mxu0 %v1076
    %1205 = vmatpush.bf16.msra.mxu0 %v1074
    %1206 = vmatpush.bf16.msra.mxu0 %v1072
    %1207 = vmatpush.bf16.msra.mxu0 %v1070
    %1208 = vmatpush.bf16.msra.mxu0 %v1068
    %1209 = vmatmul.bf16.gmra.mxu0 %v836
    %v1210 = vpop.f32.mrf.mxu0
    %v1211 = vadd.f32 %v1197, %v1210
    %v1212 = vpop.f32.mrf.mxu0
    %v1213 = vadd.f32 %v1199, %v1212
    %1214 = vdwg.mxu0
    %v1215 = vpack.c.bf16 %v1211, %v1169
    %v1216 = vpack.c.bf16 %v1213, %v1171
    %1217 = vst [vmem:[#allocation11] sm:$0xff] %v1215
    %1218 = vst [vmem:[#allocation11 + $0x8] sm:$0xff] %v1216
    // Predicated region
    $region50: #{tpu_custom_call.1} parent=1 // pred_check
      _
    $region51: #{tpu_custom_call.1} parent=1 // pred_check_branch
      %1220 = sbr.rel (0) target = $region53
    $region52: #{tpu_custom_call.1} parent=1 // pred_region
      %1222 = vsyncadd [#allocation4], 0
      %s1223 = sshll.u32 [#allocation11], 4
      %s1224 = int_to_ptr.vmem [resolvable:$true] %s1223
      %s1225 = sshll.u32 %s7, 4
      %s1226 = int_to_ptr.hbm [resolvable:$true] %s1225
      %1231 = dma.vmem_to_hbm [thread:$0]  %s1224, 256, %s1226, [#allocation4], 128, 128, 8
    $region53: #{tpu_custom_call.1} parent=1 // pred_fallthru
      _
    // Predicated region
    $region54: #{tpu_custom_call.1} parent=1 // pred_check
      _
    $region55: #{tpu_custom_call.1} parent=1 // pred_check_branch
      %1233 = sbr.rel (0) target = $region57
    $region56: #{tpu_custom_call.1} parent=1 // pred_region
      %1235 = dma.done [#allocation4], 256
    $region57: #{tpu_custom_call.1} parent=1 // pred_fallthru
      _
    %1236 = vsyncpa [#allocation3], 1
    %1237 = vsyncpa [#allocation6], 1
    %1238 = vsyncpa [#allocation9], 1
    %1239 = vsyncpa [#allocation4], 1

</llo_original>
